<compile_context>
chip_gen: v6e
topology: v6e:2x2x1
jax: 0.10.0
libtpu: 0.0.40
codegen_flags: <defaults>
</compile_context>

<pallas_src>
import functools

import jax
import jax.numpy as jnp
from jax.experimental import pallas as pl
from jax.experimental.pallas import tpu as pltpu

LN_EPS = 1e-5   # nn.LayerNorm default
LANE = 128      # lane-padded width of the output head


def _round_up(n, m):
    return ((n + m - 1) // m) * m


def _cdiv(a, b):
    return -(-a // b)


def _bf16_valu_ok():
    """bf16 elementwise math is native on v6e / v7x; stay f32 elsewhere."""
    try:
        kind = jax.devices()[0].device_kind.lower()
    except Exception:
        return False
    return ("v6" in kind) or ("v7" in kind) or ("7x" in kind)


def _choose_batch_tile(B, max_tile=512):
    """Pick a batch tile: multiple of 16, <= max_tile, >= 2 grid steps when
    the batch is large enough (two TensorCores on v7x), minimal dead rows."""
    B16 = _round_up(B, 16)
    if B16 <= 32:
        return B16                      # tiny RL batch: single tile
    g_min = max(2, _cdiv(B16, max_tile))
    g_max = min(_cdiv(B16, 16), g_min + 8)
    best_key, best_tile = None, None
    for g in range(g_min, g_max + 1):
        tile = _round_up(_cdiv(B16, g), 16)
        waste = _cdiv(B16, tile) * tile - B16
        key = (waste, g)                # minimal padding, then fewer steps
        if best_key is None or key < best_key:
            best_key, best_tile = key, tile
    return best_tile


def _dqn_kernel(x_ref, w1_ref, p1_ref, w2_ref, p2_ref, w3_ref, p3_ref,
                w4_ref, b4_ref, o_ref, *, affine_dtype):
    """Fused Linear->ReLU->LayerNorm x3 + lane-padded output Linear.

    x_ref is f32 (cast to bf16 in-kernel), w*_ref are bf16, p*_ref are packed
    (3, width) f32 rows [bias, gamma, beta].  MXU accumulation and LayerNorm
    statistics are f32; the normalize/affine pass runs in `affine_dtype`
    (bf16 on v6e/v7x, f32 on v5e).
    """
    x = x_ref[...].astype(jnp.bfloat16)

    def hidden_block(h_bf16, w_ref, p_ref):
        b = p_ref[0:1, :]
        g = p_ref[1:2, :]
        be = p_ref[2:3, :]
        # MXU matmul with f32 accumulation; bias + ReLU in f32 (feeds stats).
        h = jnp.dot(h_bf16, w_ref[...], preferred_element_type=jnp.float32)
        h = jnp.maximum(h + b, 0.0)
        # Single-pass LayerNorm stats (both reductions from the same h).
        mean = jnp.mean(h, axis=-1, keepdims=True)
        msq = jnp.mean(h * h, axis=-1, keepdims=True)
        inv = jax.lax.rsqrt(msq - mean * mean + LN_EPS)
        # Normalize + affine (+ the cast feeding the next matmul) in
        # affine_dtype; bf16 halves VALU/vreg pressure on v6e/v7x.
        hd = h.astype(affine_dtype)
        out = (hd - mean.astype(affine_dtype)) * inv.astype(affine_dtype)
        out = out * g.astype(affine_dtype) + be.astype(affine_dtype)
        return out.astype(jnp.bfloat16)

    h = hidden_block(x, w1_ref, p1_ref)
    h = hidden_block(h, w2_ref, p2_ref)
    h = hidden_block(h, w3_ref, p3_ref)

    # Output head: lane-padded Linear(128 -> 128); padded columns are zero.
    out = jnp.dot(h, w4_ref[...], preferred_element_type=jnp.float32)
    out = out + b4_ref[...]
    o_ref[...] = out.astype(o_ref.dtype)


@functools.partial(jax.jit, static_argnames=("batch_tile", "bf16_affine"))
def _dqn_pallas(xp, w1, p1, w2, p2, w3, p3, w4p, b4p, batch_tile, bf16_affine):
    Bp, in_size = xp.shape
    grid = Bp // batch_tile
    affine_dtype = jnp.bfloat16 if bf16_affine else jnp.float32

    # Weights / packed params are replicated (constant block index) so Pallas
    # keeps them VMEM-resident across grid steps; only x / out are tiled.
    def rep(arr):
        return pl.BlockSpec(arr.shape, lambda i: (0, 0))

    in_specs = [
        pl.BlockSpec((batch_tile, in_size), lambda i: (i, 0)),
        rep(w1), rep(p1),
        rep(w2), rep(p2),
        rep(w3), rep(p3),
        rep(w4p), rep(b4p),
    ]
    out_specs = pl.BlockSpec((batch_tile, LANE), lambda i: (i, 0))

    return pl.pallas_call(
        functools.partial(_dqn_kernel, affine_dtype=affine_dtype),
        out_shape=jax.ShapeDtypeStruct((Bp, LANE), jnp.bfloat16),
        grid_spec=pltpu.PrefetchScalarGridSpec(
            num_scalar_prefetch=0,
            grid=(grid,),
            in_specs=in_specs,
            out_specs=out_specs,
        ),
        compiler_params=pltpu.CompilerParams(
            dimension_semantics=("parallel",),
        ),
    )(xp, w1, p1, w2, p2, w3, p3, w4p, b4p)


def dqn_forward(x, params, max_batch_tile=512):
    """x: (B, input_size) float32.  params: dict from init_dqn_params."""
    B, _ = x.shape
    out_size = params["out_size"]

    tile = _choose_batch_tile(B, max_batch_tile)
    B_pad = _round_up(B, tile)
    xp = x if B_pad == B else jnp.pad(x, ((0, B_pad - B), (0, 0)))

    out = _dqn_pallas(
        xp,
        params["w1"], params["p1"],
        params["w2"], params["p2"],
        params["w3"], params["p3"],
        params["w4p"], params["b4p"],
        batch_tile=tile,
        bf16_affine=_bf16_valu_ok(),
    )
    return out[:B, :out_size].astype(jnp.float32)


def init_dqn_params(key, input_size, output_size):
    """Parameter init matching torch.nn.Linear defaults
    (U(-1/sqrt(fan_in), 1/sqrt(fan_in))) and LayerNorm (gamma=1, beta=0).

    Storage layout for the kernel:
      w{i}  : (in_features, out_features) bf16  (matmul weights)
      p{i}  : (3, width) f32  rows = [bias, gamma, beta]   for layers 1..3
      w4p   : (128, 128) bf16  output weight zero-padded on columns
      b4p   : (1, 128)   f32   output bias zero-padded
    """
    dims = [(input_size, 256), (256, 256), (256, 128), (128, output_size)]
    keys = jax.random.split(key, 2 * len(dims))

    ws, bs = [], []
    for idx, (fan_in, fan_out) in enumerate(dims):
        bound = 1.0 / (fan_in ** 0.5)
        w = jax.random.uniform(keys[2 * idx], (fan_in, fan_out),
                               jnp.float32, -bound, bound)
        b = jax.random.uniform(keys[2 * idx + 1], (1, fan_out),
                               jnp.float32, -bound, bound)
        ws.append(w)
        bs.append(b)

    params = {"out_size": output_size}
    for i, width in zip((1, 2, 3), (256, 256, 128)):
        params[f"w{i}"] = ws[i - 1].astype(jnp.bfloat16)
        params[f"p{i}"] = jnp.concatenate(
            [bs[i - 1],                             # bias
             jnp.ones((1, width), jnp.float32),     # gamma
             jnp.zeros((1, width), jnp.float32)],   # beta
            axis=0)

    # Lane-pad the output head to 128 columns with zeros.
    w4, b4 = ws[3], bs[3]
    pad_cols = LANE - output_size
    params["w4p"] = jnp.pad(w4, ((0, 0), (0, pad_cols))).astype(jnp.bfloat16)
    params["b4p"] = jnp.pad(b4, ((0, 0), (0, pad_cols)))
    return params


def dqn_reference(x, params):
    """Pure-JAX f32 reference (weights cast back from bf16 storage)."""
    def ln(h, g, b):
        mean = jnp.mean(h, axis=-1, keepdims=True)
        var = jnp.mean(jnp.square(h - mean), axis=-1, keepdims=True)
        return (h - mean) * jax.lax.rsqrt(var + LN_EPS) * g + b

    h = x
    for i in (1, 2, 3):
        w = params[f"w{i}"].astype(jnp.float32)
        p = params[f"p{i}"]
        h = jnp.maximum(h @ w + p[0:1, :], 0.0)
        h = ln(h, p[1:2, :], p[2:3, :])
    out = h @ params["w4p"].astype(jnp.float32) + params["b4p"]
    return out[:, :params["out_size"]]


if __name__ == "__main__":
    INPUT_SIZE = 16   # state-vector dimension
    OUTPUT_SIZE = 4   # number of discrete actions
    BATCH = 8

    key = jax.random.PRNGKey(0)
    kx, kp, kx2 = jax.random.split(key, 3)
    params = init_dqn_params(kp, INPUT_SIZE, OUTPUT_SIZE)

    # Small latency-bound batch (single 16-row tile, padded from 8).
    x = jax.random.normal(kx, (BATCH, INPUT_SIZE), jnp.float32)
    out = jax.block_until_ready(dqn_forward(x, params))
    ref = dqn_reference(x, params)
    assert out.shape == (BATCH, OUTPUT_SIZE), out.shape
    assert jnp.allclose(out, ref, atol=5e-2, rtol=5e-2), \
        "mismatch vs reference (small batch)"

    # Larger batch: adaptive tiling picks tile=192, grid=2 (zero pad waste,
    # both v7x TensorCores busy on the parallel grid axis).
    x2 = jax.random.normal(kx2, (384, INPUT_SIZE), jnp.float32)
    out2 = jax.block_until_ready(dqn_forward(x2, params))
    ref2 = dqn_reference(x2, params)
    assert out2.shape == (384, OUTPUT_SIZE), out2.shape
    assert jnp.allclose(out2, ref2, atol=5e-2, rtol=5e-2), \
        "mismatch vs reference (large batch)"

    print("KERNEL_OK")
</pallas_src>

<mosaic_0001>
module attributes {stable_mosaic.version = 11 : i64} {
  func.func @_dqn_kernel(%arg0: i32, %arg1: memref<16x16xf32, #tpu.memory_space<vmem>>, %arg2: memref<16x256xbf16, #tpu.memory_space<vmem>>, %arg3: memref<3x256xf32, #tpu.memory_space<vmem>>, %arg4: memref<256x256xbf16, #tpu.memory_space<vmem>>, %arg5: memref<3x256xf32, #tpu.memory_space<vmem>>, %arg6: memref<256x128xbf16, #tpu.memory_space<vmem>>, %arg7: memref<3x128xf32, #tpu.memory_space<vmem>>, %arg8: memref<128x128xbf16, #tpu.memory_space<vmem>>, %arg9: memref<1x128xf32, #tpu.memory_space<vmem>>, %arg10: memref<16x128xbf16, #tpu.memory_space<vmem>>) attributes {dimension_semantics = [#tpu.dimension_semantics<parallel>], iteration_bounds = array<i64: 1>, scalar_prefetch = 0 : i64, scratch_operands = 0 : i64, tpu.core_type = #tpu.core_type<tc>, window_params = [{transform_indices = @transform_0, window_bounds = array<i64: 16, 16>}, {pipeline_mode = #tpu.pipeline_mode<synchronous>, transform_indices = @transform_1, window_bounds = array<i64: 16, 256>}, {pipeline_mode = #tpu.pipeline_mode<synchronous>, transform_indices = @transform_2, window_bounds = array<i64: 3, 256>}, {pipeline_mode = #tpu.pipeline_mode<synchronous>, transform_indices = @transform_3, window_bounds = array<i64: 256, 256>}, {pipeline_mode = #tpu.pipeline_mode<synchronous>, transform_indices = @transform_4, window_bounds = array<i64: 3, 256>}, {pipeline_mode = #tpu.pipeline_mode<synchronous>, transform_indices = @transform_5, window_bounds = array<i64: 256, 128>}, {pipeline_mode = #tpu.pipeline_mode<synchronous>, transform_indices = @transform_6, window_bounds = array<i64: 3, 128>}, {pipeline_mode = #tpu.pipeline_mode<synchronous>, transform_indices = @transform_7, window_bounds = array<i64: 128, 128>}, {pipeline_mode = #tpu.pipeline_mode<synchronous>, transform_indices = @transform_8, window_bounds = array<i64: 1, 128>}, {transform_indices = @transform_9, window_bounds = array<i64: 16, 128>}]} {
    %c0 = arith.constant 0 : index
    %c0_0 = arith.constant 0 : index
    %0 = vector.load %arg1[%c0, %c0_0] : memref<16x16xf32, #tpu.memory_space<vmem>>, vector<16x16xf32>
    %1 = arith.truncf %0 : vector<16x16xf32> to vector<16x16xbf16>
    %c0_1 = arith.constant 0 : index
    %c0_2 = arith.constant 0 : index
    %2 = vector.load %arg3[%c0_1, %c0_2] : memref<3x256xf32, #tpu.memory_space<vmem>>, vector<1x256xf32>
    %c1 = arith.constant 1 : index
    %c0_3 = arith.constant 0 : index
    %3 = vector.load %arg3[%c1, %c0_3] : memref<3x256xf32, #tpu.memory_space<vmem>>, vector<1x256xf32>
    %c2 = arith.constant 2 : index
    %c0_4 = arith.constant 0 : index
    %4 = vector.load %arg3[%c2, %c0_4] : memref<3x256xf32, #tpu.memory_space<vmem>>, vector<1x256xf32>
    %c0_5 = arith.constant 0 : index
    %c0_6 = arith.constant 0 : index
    %5 = vector.load %arg2[%c0_5, %c0_6] : memref<16x256xbf16, #tpu.memory_space<vmem>>, vector<16x256xbf16>
    %cst = arith.constant dense<0.000000e+00> : vector<16x256xf32>
    %6 = tpu.matmul %1, %5, %cst {dimension_numbers = #tpu.dot_dimension_numbers<[1], [0], [0], [1], [0, 0, 1, 1], [], []>} : vector<16x16xbf16>, vector<16x256xbf16>, vector<16x256xf32> -> vector<16x256xf32>
    %7 = vector.broadcast %2 : vector<1x256xf32> to vector<16x256xf32>
    %8 = arith.addf %6, %7 : vector<16x256xf32>
    %cst_7 = arith.constant 0.000000e+00 : f32
    %9 = vector.broadcast %cst_7 : f32 to vector<16x256xf32>
    %10 = arith.maximumf %8, %9 : vector<16x256xf32>
    %cst_8 = arith.constant dense<0.000000e+00> : vector<16xf32>
    %11 = vector.multi_reduction <add>, %10, %cst_8 [1] : vector<16x256xf32> to vector<16xf32>
    %12 = vector.shape_cast %11 : vector<16xf32> to vector<16x1xf32>
    %cst_9 = arith.constant 2.560000e+02 : f32
    %13 = vector.broadcast %cst_9 : f32 to vector<16x1xf32>
    %14 = arith.divf %12, %13 : vector<16x1xf32>
    %15 = arith.mulf %10, %10 : vector<16x256xf32>
    %cst_10 = arith.constant dense<0.000000e+00> : vector<16xf32>
    %16 = vector.multi_reduction <add>, %15, %cst_10 [1] : vector<16x256xf32> to vector<16xf32>
    %17 = vector.shape_cast %16 : vector<16xf32> to vector<16x1xf32>
    %cst_11 = arith.constant 2.560000e+02 : f32
    %18 = vector.broadcast %cst_11 : f32 to vector<16x1xf32>
    %19 = arith.divf %17, %18 : vector<16x1xf32>
    %20 = arith.mulf %14, %14 : vector<16x1xf32>
    %21 = arith.subf %19, %20 : vector<16x1xf32>
    %cst_12 = arith.constant 9.99999974E-6 : f32
    %22 = vector.broadcast %cst_12 : f32 to vector<16x1xf32>
    %23 = arith.addf %21, %22 : vector<16x1xf32>
    %24 = math.rsqrt %23 : vector<16x1xf32>
    %25 = vector.broadcast %14 : vector<16x1xf32> to vector<16x256xf32>
    %26 = arith.subf %10, %25 : vector<16x256xf32>
    %27 = vector.broadcast %24 : vector<16x1xf32> to vector<16x256xf32>
    %28 = arith.mulf %26, %27 : vector<16x256xf32>
    %29 = vector.broadcast %3 : vector<1x256xf32> to vector<16x256xf32>
    %30 = arith.mulf %28, %29 : vector<16x256xf32>
    %31 = vector.broadcast %4 : vector<1x256xf32> to vector<16x256xf32>
    %32 = arith.addf %30, %31 : vector<16x256xf32>
    %33 = arith.truncf %32 : vector<16x256xf32> to vector<16x256xbf16>
    %c0_13 = arith.constant 0 : index
    %c0_14 = arith.constant 0 : index
    %34 = vector.load %arg5[%c0_13, %c0_14] : memref<3x256xf32, #tpu.memory_space<vmem>>, vector<1x256xf32>
    %c1_15 = arith.constant 1 : index
    %c0_16 = arith.constant 0 : index
    %35 = vector.load %arg5[%c1_15, %c0_16] : memref<3x256xf32, #tpu.memory_space<vmem>>, vector<1x256xf32>
    %c2_17 = arith.constant 2 : index
    %c0_18 = arith.constant 0 : index
    %36 = vector.load %arg5[%c2_17, %c0_18] : memref<3x256xf32, #tpu.memory_space<vmem>>, vector<1x256xf32>
    %c0_19 = arith.constant 0 : index
    %c0_20 = arith.constant 0 : index
    %37 = vector.load %arg4[%c0_19, %c0_20] : memref<256x256xbf16, #tpu.memory_space<vmem>>, vector<256x256xbf16>
    %cst_21 = arith.constant dense<0.000000e+00> : vector<16x256xf32>
    %38 = tpu.matmul %33, %37, %cst_21 {dimension_numbers = #tpu.dot_dimension_numbers<[1], [0], [0], [1], [0, 0, 1, 1], [], []>} : vector<16x256xbf16>, vector<256x256xbf16>, vector<16x256xf32> -> vector<16x256xf32>
    %39 = vector.broadcast %34 : vector<1x256xf32> to vector<16x256xf32>
    %40 = arith.addf %38, %39 : vector<16x256xf32>
    %cst_22 = arith.constant 0.000000e+00 : f32
    %41 = vector.broadcast %cst_22 : f32 to vector<16x256xf32>
    %42 = arith.maximumf %40, %41 : vector<16x256xf32>
    %cst_23 = arith.constant dense<0.000000e+00> : vector<16xf32>
    %43 = vector.multi_reduction <add>, %42, %cst_23 [1] : vector<16x256xf32> to vector<16xf32>
    %44 = vector.shape_cast %43 : vector<16xf32> to vector<16x1xf32>
    %cst_24 = arith.constant 2.560000e+02 : f32
    %45 = vector.broadcast %cst_24 : f32 to vector<16x1xf32>
    %46 = arith.divf %44, %45 : vector<16x1xf32>
    %47 = arith.mulf %42, %42 : vector<16x256xf32>
    %cst_25 = arith.constant dense<0.000000e+00> : vector<16xf32>
    %48 = vector.multi_reduction <add>, %47, %cst_25 [1] : vector<16x256xf32> to vector<16xf32>
    %49 = vector.shape_cast %48 : vector<16xf32> to vector<16x1xf32>
    %cst_26 = arith.constant 2.560000e+02 : f32
    %50 = vector.broadcast %cst_26 : f32 to vector<16x1xf32>
    %51 = arith.divf %49, %50 : vector<16x1xf32>
    %52 = arith.mulf %46, %46 : vector<16x1xf32>
    %53 = arith.subf %51, %52 : vector<16x1xf32>
    %cst_27 = arith.constant 9.99999974E-6 : f32
    %54 = vector.broadcast %cst_27 : f32 to vector<16x1xf32>
    %55 = arith.addf %53, %54 : vector<16x1xf32>
    %56 = math.rsqrt %55 : vector<16x1xf32>
    %57 = vector.broadcast %46 : vector<16x1xf32> to vector<16x256xf32>
    %58 = arith.subf %42, %57 : vector<16x256xf32>
    %59 = vector.broadcast %56 : vector<16x1xf32> to vector<16x256xf32>
    %60 = arith.mulf %58, %59 : vector<16x256xf32>
    %61 = vector.broadcast %35 : vector<1x256xf32> to vector<16x256xf32>
    %62 = arith.mulf %60, %61 : vector<16x256xf32>
    %63 = vector.broadcast %36 : vector<1x256xf32> to vector<16x256xf32>
    %64 = arith.addf %62, %63 : vector<16x256xf32>
    %65 = arith.truncf %64 : vector<16x256xf32> to vector<16x256xbf16>
    %c0_28 = arith.constant 0 : index
    %c0_29 = arith.constant 0 : index
    %66 = vector.load %arg7[%c0_28, %c0_29] : memref<3x128xf32, #tpu.memory_space<vmem>>, vector<1x128xf32>
    %c1_30 = arith.constant 1 : index
    %c0_31 = arith.constant 0 : index
    %67 = vector.load %arg7[%c1_30, %c0_31] : memref<3x128xf32, #tpu.memory_space<vmem>>, vector<1x128xf32>
    %c2_32 = arith.constant 2 : index
    %c0_33 = arith.constant 0 : index
    %68 = vector.load %arg7[%c2_32, %c0_33] : memref<3x128xf32, #tpu.memory_space<vmem>>, vector<1x128xf32>
    %c0_34 = arith.constant 0 : index
    %c0_35 = arith.constant 0 : index
    %69 = vector.load %arg6[%c0_34, %c0_35] : memref<256x128xbf16, #tpu.memory_space<vmem>>, vector<256x128xbf16>
    %cst_36 = arith.constant dense<0.000000e+00> : vector<16x128xf32>
    %70 = tpu.matmul %65, %69, %cst_36 {dimension_numbers = #tpu.dot_dimension_numbers<[1], [0], [0], [1], [0, 0, 1, 1], [], []>} : vector<16x256xbf16>, vector<256x128xbf16>, vector<16x128xf32> -> vector<16x128xf32>
    %71 = vector.broadcast %66 : vector<1x128xf32> to vector<16x128xf32>
    %72 = arith.addf %70, %71 : vector<16x128xf32>
    %cst_37 = arith.constant 0.000000e+00 : f32
    %73 = vector.broadcast %cst_37 : f32 to vector<16x128xf32>
    %74 = arith.maximumf %72, %73 : vector<16x128xf32>
    %cst_38 = arith.constant dense<0.000000e+00> : vector<16xf32>
    %75 = vector.multi_reduction <add>, %74, %cst_38 [1] : vector<16x128xf32> to vector<16xf32>
    %76 = vector.shape_cast %75 : vector<16xf32> to vector<16x1xf32>
    %cst_39 = arith.constant 1.280000e+02 : f32
    %77 = vector.broadcast %cst_39 : f32 to vector<16x1xf32>
    %78 = arith.divf %76, %77 : vector<16x1xf32>
    %79 = arith.mulf %74, %74 : vector<16x128xf32>
    %cst_40 = arith.constant dense<0.000000e+00> : vector<16xf32>
    %80 = vector.multi_reduction <add>, %79, %cst_40 [1] : vector<16x128xf32> to vector<16xf32>
    %81 = vector.shape_cast %80 : vector<16xf32> to vector<16x1xf32>
    %cst_41 = arith.constant 1.280000e+02 : f32
    %82 = vector.broadcast %cst_41 : f32 to vector<16x1xf32>
    %83 = arith.divf %81, %82 : vector<16x1xf32>
    %84 = arith.mulf %78, %78 : vector<16x1xf32>
    %85 = arith.subf %83, %84 : vector<16x1xf32>
    %cst_42 = arith.constant 9.99999974E-6 : f32
    %86 = vector.broadcast %cst_42 : f32 to vector<16x1xf32>
    %87 = arith.addf %85, %86 : vector<16x1xf32>
    %88 = math.rsqrt %87 : vector<16x1xf32>
    %89 = vector.broadcast %78 : vector<16x1xf32> to vector<16x128xf32>
    %90 = arith.subf %74, %89 : vector<16x128xf32>
    %91 = vector.broadcast %88 : vector<16x1xf32> to vector<16x128xf32>
    %92 = arith.mulf %90, %91 : vector<16x128xf32>
    %93 = vector.broadcast %67 : vector<1x128xf32> to vector<16x128xf32>
    %94 = arith.mulf %92, %93 : vector<16x128xf32>
    %95 = vector.broadcast %68 : vector<1x128xf32> to vector<16x128xf32>
    %96 = arith.addf %94, %95 : vector<16x128xf32>
    %97 = arith.truncf %96 : vector<16x128xf32> to vector<16x128xbf16>
    %c0_43 = arith.constant 0 : index
    %c0_44 = arith.constant 0 : index
    %98 = vector.load %arg8[%c0_43, %c0_44] : memref<128x128xbf16, #tpu.memory_space<vmem>>, vector<128x128xbf16>
    %cst_45 = arith.constant dense<0.000000e+00> : vector<16x128xf32>
    %99 = tpu.matmul %97, %98, %cst_45 {dimension_numbers = #tpu.dot_dimension_numbers<[1], [0], [0], [1], [0, 0, 1, 1], [], []>} : vector<16x128xbf16>, vector<128x128xbf16>, vector<16x128xf32> -> vector<16x128xf32>
    %c0_46 = arith.constant 0 : index
    %c0_47 = arith.constant 0 : index
    %100 = vector.load %arg9[%c0_46, %c0_47] : memref<1x128xf32, #tpu.memory_space<vmem>>, vector<1x128xf32>
    %101 = vector.broadcast %100 : vector<1x128xf32> to vector<16x128xf32>
    %102 = arith.addf %99, %101 : vector<16x128xf32>
    %103 = arith.truncf %102 : vector<16x128xf32> to vector<16x128xbf16>
    %c0_48 = arith.constant 0 : index
    %c0_49 = arith.constant 0 : index
    %104 = vector.load %arg10[%c0_48, %c0_49] : memref<16x128xbf16, #tpu.memory_space<vmem>>, vector<16x128xbf16>
    tpu.vector_store %arg10[%c0_48, %c0_49], %103 {strides = array<i32>} : memref<16x128xbf16, #tpu.memory_space<vmem>>, vector<16x128xbf16>,
    return
  }
  func.func @transform_0(%arg0: i32) -> (i32, i32) {
    %c0_i32 = arith.constant 0 : i32
    %c0_i32_0 = arith.constant 0 : i32
    return %arg0, %c0_i32 : i32, i32
  }
  func.func @transform_1(%arg0: i32) -> (i32, i32) {
    %c0_i32 = arith.constant 0 : i32
    %c0_i32_0 = arith.constant 0 : i32
    %c0_i32_1 = arith.constant 0 : i32
    return %c0_i32, %c0_i32_0 : i32, i32
  }
  func.func @transform_2(%arg0: i32) -> (i32, i32) {
    %c0_i32 = arith.constant 0 : i32
    %c0_i32_0 = arith.constant 0 : i32
    %c0_i32_1 = arith.constant 0 : i32
    return %c0_i32, %c0_i32_0 : i32, i32
  }
  func.func @transform_3(%arg0: i32) -> (i32, i32) {
    %c0_i32 = arith.constant 0 : i32
    %c0_i32_0 = arith.constant 0 : i32
    %c0_i32_1 = arith.constant 0 : i32
    return %c0_i32, %c0_i32_0 : i32, i32
  }
  func.func @transform_4(%arg0: i32) -> (i32, i32) {
    %c0_i32 = arith.constant 0 : i32
    %c0_i32_0 = arith.constant 0 : i32
    %c0_i32_1 = arith.constant 0 : i32
    return %c0_i32, %c0_i32_0 : i32, i32
  }
  func.func @transform_5(%arg0: i32) -> (i32, i32) {
    %c0_i32 = arith.constant 0 : i32
    %c0_i32_0 = arith.constant 0 : i32
    %c0_i32_1 = arith.constant 0 : i32
    return %c0_i32, %c0_i32_0 : i32, i32
  }
  func.func @transform_6(%arg0: i32) -> (i32, i32) {
    %c0_i32 = arith.constant 0 : i32
    %c0_i32_0 = arith.constant 0 : i32
    %c0_i32_1 = arith.constant 0 : i32
    return %c0_i32, %c0_i32_0 : i32, i32
  }
  func.func @transform_7(%arg0: i32) -> (i32, i32) {
    %c0_i32 = arith.constant 0 : i32
    %c0_i32_0 = arith.constant 0 : i32
    %c0_i32_1 = arith.constant 0 : i32
    return %c0_i32, %c0_i32_0 : i32, i32
  }
  func.func @transform_8(%arg0: i32) -> (i32, i32) {
    %c0_i32 = arith.constant 0 : i32
    %c0_i32_0 = arith.constant 0 : i32
    %c0_i32_1 = arith.constant 0 : i32
    return %c0_i32, %c0_i32_0 : i32, i32
  }
  func.func @transform_9(%arg0: i32) -> (i32, i32) {
    %c0_i32 = arith.constant 0 : i32
    %c0_i32_0 = arith.constant 0 : i32
    return %arg0, %c0_i32 : i32, i32
  }
}

</mosaic_0001>

<llo_original>
// kernel: _dqn_pallas.1
$region0: #{_dqn_pallas.1}
  #allocation0 [shape = 'u32[]', space=smem, size = 0x4, offset = 0x4, fixed_abs, tag = 'smem constant byte address 0x4 - core index']
  #allocation1 [shape = 'u32[144,128]{1,0:T(1,128)}', space=vmem, size = 0x12000, scoped, tag = 'internal scratch']
  %s0 = inlined_call_operand.hbm [shape: f32[16,16], index: 0, kind: input, shape index: {}]
  %s1 = inlined_call_operand.hbm [shape: bf16[16,256], index: 1, kind: input, shape index: {}]
  %s2 = inlined_call_operand.hbm [shape: f32[3,256], index: 2, kind: input, shape index: {}]
  %s3 = inlined_call_operand.hbm [shape: bf16[256,256], index: 3, kind: input, shape index: {}]
  %s4 = inlined_call_operand.hbm [shape: f32[3,256], index: 4, kind: input, shape index: {}]
  %s5 = inlined_call_operand.hbm [shape: bf16[256,128], index: 5, kind: input, shape index: {}]
  %s6 = inlined_call_operand.vmem [shape: f32[3,128], index: 6, kind: input, shape index: {}]
  %s7 = inlined_call_operand.hbm [shape: bf16[128,128], index: 7, kind: input, shape index: {}]
  %s8 = inlined_call_operand.vmem [shape: f32[1,128], index: 8, kind: input, shape index: {}]
  %s9 = inlined_call_operand.hbm [shape: bf16[16,128], index: 9, kind: output, shape index: {}]
  %s10 = sld [smem:[#allocation0]]
  $region74: #{_dqn_pallas.1} parent=0
    _
  %s12 = ssub.s32 1, %s10
  %s13 = scalar_select 0, %s12, %s10
  $region1: #{_dqn_pallas.1} parent=0
    #allocation2 [shape = 'u8[8192]{0}', space=vmem, size = 0x2000, scoped, tag = 'input window, operand 0, single buffered']
    #allocation3 [shape = 's32[1]{0}', space=sflag, size = 0x4, scoped, tag = 'scoped memory for _dqn_pallas.1']
    #allocation4 [shape = 's32[1]{0}', space=sflag, size = 0x4, scoped, tag = 'scoped memory for _dqn_pallas.1']
    #allocation5 [shape = 'u8[8192]{0}', space=vmem, size = 0x2000, scoped, tag = 'input window, operand 1, single buffered']
    #allocation6 [shape = 's32[1]{0}', space=sflag, size = 0x4, scoped, tag = 'scoped memory for _dqn_pallas.1']
    #allocation7 [shape = 'u8[4096]{0}', space=vmem, size = 0x1000, scoped, tag = 'input window, operand 2, single buffered']
    #allocation8 [shape = 'u8[131072]{0}', space=vmem, size = 0x20000, scoped, tag = 'input window, operand 3, single buffered']
    #allocation9 [shape = 's32[1]{0}', space=sflag, size = 0x4, scoped, tag = 'scoped memory for _dqn_pallas.1']
    #allocation10 [shape = 'u8[4096]{0}', space=vmem, size = 0x1000, scoped, tag = 'input window, operand 4, single buffered']
    #allocation11 [shape = 'u8[65536]{0}', space=vmem, size = 0x10000, scoped, tag = 'input window, operand 5, single buffered']
    #allocation12 [shape = 's32[1]{0}', space=sflag, size = 0x4, scoped, tag = 'scoped memory for _dqn_pallas.1']
    #allocation13 [shape = 'u8[32768]{0}', space=vmem, size = 0x8000, scoped, tag = 'input window, operand 7, single buffered']
    #allocation14 [shape = 'u8[4096]{0}', space=vmem, size = 0x1000, scoped, tag = 'output window, operand 0, single buffered']
    %14 = vsyncpa [#allocation3], 0
    %15 = vsyncpa [#allocation6], 0
    %16 = vsyncpa [#allocation9], 0
    %17 = vsyncpa [#allocation12], 0
    %18 = vsyncpa [#allocation4], 0
    // Predicated region
    $region2: #{_dqn_pallas.1} parent=1 // pred_check
      _
    $region3: #{_dqn_pallas.1} parent=1 // pred_check_branch
      %20 = sbr.rel (0) target = $region5
    $region4: #{_dqn_pallas.1} parent=1 // pred_region
      %s22 = ssub.s32 256, 256
      %23 = vsyncadd [#allocation3], %s22
      %s24 = sshll.u32 [#allocation2], 4
      %s25 = int_to_ptr.vmem [resolvable:$true] %s24
      %30 = dma.hbm_to_vmem [thread:$0]  %s0, 256, %s25, [#allocation3], 128, 128, 8
    $region5: #{_dqn_pallas.1} parent=1 // pred_fallthru
      _
    // Predicated region
    $region6: #{_dqn_pallas.1} parent=1 // pred_check
      _
    $region7: #{_dqn_pallas.1} parent=1 // pred_check_branch
      %32 = sbr.rel (0) target = $region9
    $region8: #{_dqn_pallas.1} parent=1 // pred_region
      %s34 = ssub.s32 256, 256
      %35 = vsyncadd [#allocation6], %s34
      %s36 = sshll.u32 [#allocation5], 4
      %s37 = int_to_ptr.vmem [resolvable:$true] %s36
      %42 = dma.hbm_to_vmem [thread:$0]  %s1, 256, %s37, [#allocation6], 128, 128, 8
    $region9: #{_dqn_pallas.1} parent=1 // pred_fallthru
      _
    // Predicated region
    $region10: #{_dqn_pallas.1} parent=1 // pred_check
      _
    $region11: #{_dqn_pallas.1} parent=1 // pred_check_branch
      %44 = sbr.rel (0) target = $region13
    $region12: #{_dqn_pallas.1} parent=1 // pred_region
      %s46 = ssub.s32 128, 128
      %47 = vsyncadd [#allocation6], %s46
      %s49 = sshll.u32 [#allocation7], 4
      %s50 = int_to_ptr.vmem [resolvable:$true] %s49
      %52 = dma.hbm_to_vmem [thread:$0]  %s2, 128, %s50, [#allocation6]
    $region13: #{_dqn_pallas.1} parent=1 // pred_fallthru
      _
    // Predicated region
    $region14: #{_dqn_pallas.1} parent=1 // pred_check
      _
    $region15: #{_dqn_pallas.1} parent=1 // pred_check_branch
      %54 = sbr.rel (0) target = $region17
    $region16: #{_dqn_pallas.1} parent=1 // pred_region
      %s56 = ssub.s32 4096, 4096
      %57 = vsyncadd [#allocation9], %s56
      %s58 = sshll.u32 [#allocation8], 4
      %s59 = int_to_ptr.vmem [resolvable:$true] %s58
      %64 = dma.hbm_to_vmem [thread:$0]  %s3, 4096, %s59, [#allocation9], 128, 128, 8
    $region17: #{_dqn_pallas.1} parent=1 // pred_fallthru
      _
    // Predicated region
    $region18: #{_dqn_pallas.1} parent=1 // pred_check
      _
    $region19: #{_dqn_pallas.1} parent=1 // pred_check_branch
      %66 = sbr.rel (0) target = $region21
    $region20: #{_dqn_pallas.1} parent=1 // pred_region
      %s68 = ssub.s32 128, 128
      %69 = vsyncadd [#allocation9], %s68
      %s71 = sshll.u32 [#allocation10], 4
      %s72 = int_to_ptr.vmem [resolvable:$true] %s71
      %74 = dma.hbm_to_vmem [thread:$0]  %s4, 128, %s72, [#allocation9]
    $region21: #{_dqn_pallas.1} parent=1 // pred_fallthru
      _
    // Predicated region
    $region22: #{_dqn_pallas.1} parent=1 // pred_check
      _
    $region23: #{_dqn_pallas.1} parent=1 // pred_check_branch
      %76 = sbr.rel (0) target = $region25
    $region24: #{_dqn_pallas.1} parent=1 // pred_region
      %s78 = ssub.s32 2048, 2048
      %79 = vsyncadd [#allocation12], %s78
      %s80 = sshll.u32 [#allocation11], 4
      %s81 = int_to_ptr.vmem [resolvable:$true] %s80
      %86 = dma.hbm_to_vmem [thread:$0]  %s5, 2048, %s81, [#allocation12], 64, 64, 4
    $region25: #{_dqn_pallas.1} parent=1 // pred_fallthru
      _
    // Predicated region
    $region26: #{_dqn_pallas.1} parent=1 // pred_check
      _
    $region27: #{_dqn_pallas.1} parent=1 // pred_check_branch
      %88 = sbr.rel (0) target = $region29
    $region28: #{_dqn_pallas.1} parent=1 // pred_region
      _
    $region29: #{_dqn_pallas.1} parent=1 // pred_fallthru
      _
    // Predicated region
    $region30: #{_dqn_pallas.1} parent=1 // pred_check
      _
    $region31: #{_dqn_pallas.1} parent=1 // pred_check_branch
      %90 = sbr.rel (0) target = $region33
    $region32: #{_dqn_pallas.1} parent=1 // pred_region
      %s92 = ssub.s32 1024, 1024
      %93 = vsyncadd [#allocation12], %s92
      %s94 = sshll.u32 [#allocation13], 4
      %s95 = int_to_ptr.vmem [resolvable:$true] %s94
      %100 = dma.hbm_to_vmem [thread:$0]  %s7, 1024, %s95, [#allocation12], 64, 64, 4
    $region33: #{_dqn_pallas.1} parent=1 // pred_fallthru
      _
    // Predicated region
    $region34: #{_dqn_pallas.1} parent=1 // pred_check
      _
    $region35: #{_dqn_pallas.1} parent=1 // pred_check_branch
      %102 = sbr.rel (0) target = $region37
    $region36: #{_dqn_pallas.1} parent=1 // pred_region
      _
    $region37: #{_dqn_pallas.1} parent=1 // pred_fallthru
      _
    // Predicated region
    $region38: #{_dqn_pallas.1} parent=1 // pred_check
      _
    $region39: #{_dqn_pallas.1} parent=1 // pred_check_branch
      %104 = sbr.rel (0) target = $region41
    $region40: #{_dqn_pallas.1} parent=1 // pred_region
      %105 = dma.done [#allocation3], 256
    $region41: #{_dqn_pallas.1} parent=1 // pred_fallthru
      _
    // Predicated region
    $region42: #{_dqn_pallas.1} parent=1 // pred_check
      _
    $region43: #{_dqn_pallas.1} parent=1 // pred_check_branch
      %107 = sbr.rel (0) target = $region45
    $region44: #{_dqn_pallas.1} parent=1 // pred_region
      %108 = dma.done [#allocation6], 256
    $region45: #{_dqn_pallas.1} parent=1 // pred_fallthru
      _
    // Predicated region
    $region46: #{_dqn_pallas.1} parent=1 // pred_check
      _
    $region47: #{_dqn_pallas.1} parent=1 // pred_check_branch
      %110 = sbr.rel (0) target = $region49
    $region48: #{_dqn_pallas.1} parent=1 // pred_region
      %111 = dma.done [#allocation6], 128
    $region49: #{_dqn_pallas.1} parent=1 // pred_fallthru
      _
    // Predicated region
    $region50: #{_dqn_pallas.1} parent=1 // pred_check
      _
    $region51: #{_dqn_pallas.1} parent=1 // pred_check_branch
      %113 = sbr.rel (0) target = $region53
    $region52: #{_dqn_pallas.1} parent=1 // pred_region
      %114 = dma.done [#allocation9], 4096
    $region53: #{_dqn_pallas.1} parent=1 // pred_fallthru
      _
    // Predicated region
    $region54: #{_dqn_pallas.1} parent=1 // pred_check
      _
    $region55: #{_dqn_pallas.1} parent=1 // pred_check_branch
      %116 = sbr.rel (0) target = $region57
    $region56: #{_dqn_pallas.1} parent=1 // pred_region
      %117 = dma.done [#allocation9], 128
    $region57: #{_dqn_pallas.1} parent=1 // pred_fallthru
      _
    // Predicated region
    $region58: #{_dqn_pallas.1} parent=1 // pred_check
      _
    $region59: #{_dqn_pallas.1} parent=1 // pred_check_branch
      %119 = sbr.rel (0) target = $region61
    $region60: #{_dqn_pallas.1} parent=1 // pred_region
      %120 = dma.done [#allocation12], 2048
    $region61: #{_dqn_pallas.1} parent=1 // pred_fallthru
      _
    // Predicated region
    $region62: #{_dqn_pallas.1} parent=1 // pred_check
      _
    $region63: #{_dqn_pallas.1} parent=1 // pred_check_branch
      %122 = sbr.rel (0) target = $region65
    $region64: #{_dqn_pallas.1} parent=1 // pred_region
      %123 = dma.done [#allocation12], 1024
    $region65: #{_dqn_pallas.1} parent=1 // pred_fallthru
      _
    %v125 = vld [vmem:[#allocation2] sm:$0xff]
    %v126 = vld [vmem:[#allocation2 + $0x8] sm:$0xff]
    %v127 = vpack.c.bf16 %v126, %v125
    %v128 = vld [vmem:[#allocation7] ss:$4 sm:$0x3]
    %s129 = scalar_lea.vmem [#allocation7], 1
    %v130 = vld [vmem:[%s129] ss:$4 sm:$0x3]
    %s131 = scalar_lea.vmem [#allocation7], 2
    %v132 = vld [vmem:[%s131] ss:$4 sm:$0x3]
    %v133 = vld [vmem:[#allocation5] sm:$0xff]
    %v134 = vld [vmem:[#allocation5 + $0x8] sm:$0xff]
    %v136 = vlaneseq
    %v137 = vshrl.u32 %v136, 7
    %v138 = vsub.s32 0, %v137
    %v139 = vrot.slane %v128, %v138
    %v140 = vlaneseq
    %v141 = vshrl.u32 %v140, 7
    %v142 = vsub.s32 1, %v141
    %v143 = vrot.slane %v128, %v142
    %v148 = vunpack.c.l.b16 %v133
    %v149 = vunpack.c.h.b16 %v133
    %v150 = vunpack.c.l.b16 %v134
    %v151 = vunpack.c.h.b16 %v134
    %v152 = vpack.c.b16 %v150, %v148
    %v153 = vpack.c.b16 %v151, %v149
    %vm156 = vcmask 130048
    %v158 = vsel %vm156, %v127, 0
    %160 = vmatprep.subr.bf16.mxu0 0
    %161 = vmatpush1.bf16.msra.mxu0 0
    %162 = vmatprep.subr.bf16.mxu0 0
    %163 = vmatpush1.bf16.msra.mxu0 0
    %164 = vmatprep.subr.bf16.mxu0 0
    %165 = vmatpush1.bf16.msra.mxu0 0
    %166 = vmatprep.subr.bf16.mxu0 0
    %167 = vmatpush1.bf16.msra.mxu0 0
    %168 = vmatprep.subr.bf16.mxu0 0
    %169 = vmatpush1.bf16.msra.mxu0 0
    %170 = vmatprep.subr.bf16.mxu0 0
    %171 = vmatpush1.bf16.msra.mxu0 0
    %172 = vmatprep.subr.bf16.mxu0 0
    %173 = vmatpush1.bf16.msra.mxu0 0
    %174 = vmatprep.subr.bf16.mxu0 %v153
    %175 = vmatpush1.bf16.msra.mxu0 %v152
    %176 = vmatprep.subr.bf16.mxu0 0
    %177 = vmatpush2.bf16.msra.mxu0 0
    %178 = vmatprep.subr.bf16.mxu0 0
    %179 = vmatpush2.bf16.msra.mxu0 0
    %180 = vmatprep.subr.bf16.mxu0 0
    %181 = vmatpush2.bf16.msra.mxu0 0
    %182 = vmatprep.subr.bf16.mxu0 0
    %183 = vmatpush2.bf16.msra.mxu0 0
    %184 = vmatprep.subr.bf16.mxu0 0
    %185 = vmatpush2.bf16.msra.mxu0 0
    %186 = vmatprep.subr.bf16.mxu0 0
    %187 = vmatpush2.bf16.msra.mxu0 0
    %188 = vmatprep.subr.bf16.mxu0 0
    %189 = vmatpush2.bf16.msra.mxu0 0
    %190 = vmatprep.subr.bf16.mxu0 0
    %191 = vmatpush2.bf16.msra.mxu0 0
    %192 = vmatprep.mubr.bf16.mxu0 0
    %193 = vmatmul.mubr.bf16.gmra.mxu0 %v158
    %v194 = vpop.f32.mrf.mxu0
    %v195 = vadd.f32 %v139, %v194
    %v196 = vpop.f32.mrf.mxu0
    %v197 = vadd.f32 %v143, %v196
    %v198 = vpop.f32.mrf.mxu0
    %v199 = vadd.f32 %v139, %v198
    %v200 = vpop.f32.mrf.mxu0
    %v201 = vadd.f32 %v143, %v200
    %202 = vdwg.mxu0
    %v203 = vmax.f32 %v195, 0.0
    %v204 = vmax.f32 %v197, 0.0
    %v205 = vmax.f32 %v199, 0.0
    %v206 = vmax.f32 %v201, 0.0
    %v207 = vadd.f32 %v203, %v204
    %208 = vadd.xlane.f32.xlu0 %v207
    %v209 = vpop.xlane.xlu0 %208
    %v210 = vadd.f32 %v205, %v206
    %211 = vadd.xlane.f32.xlu0 %v210
    %v212 = vpop.xlane.xlu0 %211
    %v213 = vrcp.pop 256.0
    %v214 = vmul.f32 %v209, %v213
    %v215 = vmul.f32 %v212, %v213
    %v216 = vmul.f32 %v203, %v203
    %v217 = vmul.f32 %v204, %v204
    %v218 = vmul.f32 %v205, %v205
    %v219 = vmul.f32 %v206, %v206
    %v220 = vadd.f32 %v216, %v217
    %221 = vadd.xlane.f32.xlu0 %v220
    %v222 = vpop.xlane.xlu0 %221
    %v223 = vadd.f32 %v218, %v219
    %224 = vadd.xlane.f32.xlu0 %v223
    %v225 = vpop.xlane.xlu0 %224
    %v226 = vmul.f32 %v222, %v213
    %v227 = vmul.f32 %v225, %v213
    %v228 = vmul.f32 %v214, %v214
    %v229 = vmul.f32 %v215, %v215
    %v230 = vsub.f32 %v226, %v228
    %v231 = vsub.f32 %v227, %v229
    %v232 = vadd.f32 %v230, 1e-05
    %v233 = vadd.f32 %v231, 1e-05
    %v234 = vrsqrt.pop %v232
    %v235 = vrsqrt.pop %v233
    %v236 = vsub.f32 %v203, %v214
    %v237 = vsub.f32 %v204, %v214
    %v238 = vsub.f32 %v205, %v215
    %v239 = vsub.f32 %v206, %v215
    %v240 = vmul.f32 %v236, %v234
    %v241 = vmul.f32 %v237, %v234
    %v242 = vmul.f32 %v238, %v235
    %v243 = vmul.f32 %v239, %v235
    %v245 = vlaneseq
    %v246 = vshrl.u32 %v245, 7
    %v247 = vsub.s32 0, %v246
    %v248 = vrot.slane %v130, %v247
    %v249 = vlaneseq
    %v250 = vshrl.u32 %v249, 7
    %v251 = vsub.s32 1, %v250
    %v252 = vrot.slane %v130, %v251
    %v255 = vmul.f32 %v240, %v248
    %v256 = vmul.f32 %v241, %v252
    %v257 = vmul.f32 %v242, %v248
    %v258 = vmul.f32 %v243, %v252
    %v260 = vlaneseq
    %v261 = vshrl.u32 %v260, 7
    %v262 = vsub.s32 0, %v261
    %v263 = vrot.slane %v132, %v262
    %v264 = vlaneseq
    %v265 = vshrl.u32 %v264, 7
    %v266 = vsub.s32 1, %v265
    %v267 = vrot.slane %v132, %v266
    %v270 = vadd.f32 %v255, %v263
    %v271 = vadd.f32 %v256, %v267
    %v272 = vadd.f32 %v257, %v263
    %v273 = vadd.f32 %v258, %v267
    %v274 = vpack.c.bf16 %v272, %v270
    %v275 = vpack.c.bf16 %v273, %v271
    %v276 = vld [vmem:[#allocation10] ss:$4 sm:$0x3]
    %s277 = scalar_lea.vmem [#allocation10], 1
    %v278 = vld [vmem:[%s277] ss:$4 sm:$0x3]
    %s279 = scalar_lea.vmem [#allocation10], 2
    %v280 = vld [vmem:[%s279] ss:$4 sm:$0x3]
    %v281 = vld [vmem:[#allocation8] sm:$0xff]
    %v282 = vld [vmem:[#allocation8 + $0x8] sm:$0xff]
    %v283 = vld [vmem:[#allocation8 + $0x10] sm:$0xff]
    %v284 = vld [vmem:[#allocation8 + $0x18] sm:$0xff]
    %v285 = vld [vmem:[#allocation8 + $0x20] sm:$0xff]
    %v286 = vld [vmem:[#allocation8 + $0x28] sm:$0xff]
    %v287 = vld [vmem:[#allocation8 + $0x30] sm:$0xff]
    %v288 = vld [vmem:[#allocation8 + $0x38] sm:$0xff]
    %v289 = vld [vmem:[#allocation8 + $0x40] sm:$0xff]
    %v290 = vld [vmem:[#allocation8 + $0x48] sm:$0xff]
    %v291 = vld [vmem:[#allocation8 + $0x50] sm:$0xff]
    %v292 = vld [vmem:[#allocation8 + $0x58] sm:$0xff]
    %v293 = vld [vmem:[#allocation8 + $0x60] sm:$0xff]
    %v294 = vld [vmem:[#allocation8 + $0x68] sm:$0xff]
    %v295 = vld [vmem:[#allocation8 + $0x70] sm:$0xff]
    %v296 = vld [vmem:[#allocation8 + $0x78] sm:$0xff]
    %v297 = vld [vmem:[#allocation8 + $0x80] sm:$0xff]
    %v298 = vld [vmem:[#allocation8 + $0x88] sm:$0xff]
    %v299 = vld [vmem:[#allocation8 + $0x90] sm:$0xff]
    %v300 = vld [vmem:[#allocation8 + $0x98] sm:$0xff]
    %v301 = vld [vmem:[#allocation8 + $0xa0] sm:$0xff]
    %v302 = vld [vmem:[#allocation8 + $0xa8] sm:$0xff]
    %v303 = vld [vmem:[#allocation8 + $0xb0] sm:$0xff]
    %v304 = vld [vmem:[#allocation8 + $0xb8] sm:$0xff]
    %v305 = vld [vmem:[#allocation8 + $0xc0] sm:$0xff]
    %v306 = vld [vmem:[#allocation8 + $0xc8] sm:$0xff]
    %v307 = vld [vmem:[#allocation8 + $0xd0] sm:$0xff]
    %v308 = vld [vmem:[#allocation8 + $0xd8] sm:$0xff]
    %v309 = vld [vmem:[#allocation8 + $0xe0] sm:$0xff]
    %v310 = vld [vmem:[#allocation8 + $0xe8] sm:$0xff]
    %v311 = vld [vmem:[#allocation8 + $0xf0] sm:$0xff]
    %v312 = vld [vmem:[#allocation8 + $0xf8] sm:$0xff]
    %v314 = vlaneseq
    %v315 = vshrl.u32 %v314, 7
    %v316 = vsub.s32 0, %v315
    %v317 = vrot.slane %v276, %v316
    %v318 = vlaneseq
    %v319 = vshrl.u32 %v318, 7
    %v320 = vsub.s32 1, %v319
    %v321 = vrot.slane %v276, %v320
    %v356 = vunpack.c.l.b16 %v281
    %v357 = vunpack.c.h.b16 %v281
    %v358 = vunpack.c.l.b16 %v282
    %v359 = vunpack.c.h.b16 %v282
    %v360 = vunpack.c.l.b16 %v283
    %v361 = vunpack.c.h.b16 %v283
    %v362 = vunpack.c.l.b16 %v284
    %v363 = vunpack.c.h.b16 %v284
    %v364 = vunpack.c.l.b16 %v285
    %v365 = vunpack.c.h.b16 %v285
    %v366 = vunpack.c.l.b16 %v286
    %v367 = vunpack.c.h.b16 %v286
    %v368 = vunpack.c.l.b16 %v287
    %v369 = vunpack.c.h.b16 %v287
    %v370 = vunpack.c.l.b16 %v288
    %v371 = vunpack.c.h.b16 %v288
    %v372 = vunpack.c.l.b16 %v289
    %v373 = vunpack.c.h.b16 %v289
    %v374 = vunpack.c.l.b16 %v290
    %v375 = vunpack.c.h.b16 %v290
    %v376 = vunpack.c.l.b16 %v291
    %v377 = vunpack.c.h.b16 %v291
    %v378 = vunpack.c.l.b16 %v292
    %v379 = vunpack.c.h.b16 %v292
    %v380 = vunpack.c.l.b16 %v293
    %v381 = vunpack.c.h.b16 %v293
    %v382 = vunpack.c.l.b16 %v294
    %v383 = vunpack.c.h.b16 %v294
    %v384 = vunpack.c.l.b16 %v295
    %v385 = vunpack.c.h.b16 %v295
    %v386 = vunpack.c.l.b16 %v296
    %v387 = vunpack.c.h.b16 %v296
    %v388 = vunpack.c.l.b16 %v297
    %v389 = vunpack.c.h.b16 %v297
    %v390 = vunpack.c.l.b16 %v298
    %v391 = vunpack.c.h.b16 %v298
    %v392 = vunpack.c.l.b16 %v299
    %v393 = vunpack.c.h.b16 %v299
    %v394 = vunpack.c.l.b16 %v300
    %v395 = vunpack.c.h.b16 %v300
    %v396 = vunpack.c.l.b16 %v301
    %v397 = vunpack.c.h.b16 %v301
    %v398 = vunpack.c.l.b16 %v302
    %v399 = vunpack.c.h.b16 %v302
    %v400 = vunpack.c.l.b16 %v303
    %v401 = vunpack.c.h.b16 %v303
    %v402 = vunpack.c.l.b16 %v304
    %v403 = vunpack.c.h.b16 %v304
    %v404 = vunpack.c.l.b16 %v305
    %v405 = vunpack.c.h.b16 %v305
    %v406 = vunpack.c.l.b16 %v306
    %v407 = vunpack.c.h.b16 %v306
    %v408 = vunpack.c.l.b16 %v307
    %v409 = vunpack.c.h.b16 %v307
    %v410 = vunpack.c.l.b16 %v308
    %v411 = vunpack.c.h.b16 %v308
    %v412 = vunpack.c.l.b16 %v309
    %v413 = vunpack.c.h.b16 %v309
    %v414 = vunpack.c.l.b16 %v310
    %v415 = vunpack.c.h.b16 %v310
    %v416 = vunpack.c.l.b16 %v311
    %v417 = vunpack.c.h.b16 %v311
    %v418 = vunpack.c.l.b16 %v312
    %v419 = vunpack.c.h.b16 %v312
    %v420 = vpack.c.b16 %v358, %v356
    %v421 = vpack.c.b16 %v359, %v357
    %v422 = vpack.c.b16 %v362, %v360
    %v423 = vpack.c.b16 %v363, %v361
    %v424 = vpack.c.b16 %v366, %v364
    %v425 = vpack.c.b16 %v367, %v365
    %v426 = vpack.c.b16 %v370, %v368
    %v427 = vpack.c.b16 %v371, %v369
    %v428 = vpack.c.b16 %v374, %v372
    %v429 = vpack.c.b16 %v375, %v373
    %v430 = vpack.c.b16 %v378, %v376
    %v431 = vpack.c.b16 %v379, %v377
    %v432 = vpack.c.b16 %v382, %v380
    %v433 = vpack.c.b16 %v383, %v381
    %v434 = vpack.c.b16 %v386, %v384
    %v435 = vpack.c.b16 %v387, %v385
    %v436 = vpack.c.b16 %v390, %v388
    %v437 = vpack.c.b16 %v391, %v389
    %v438 = vpack.c.b16 %v394, %v392
    %v439 = vpack.c.b16 %v395, %v393
    %v440 = vpack.c.b16 %v398, %v396
    %v441 = vpack.c.b16 %v399, %v397
    %v442 = vpack.c.b16 %v402, %v400
    %v443 = vpack.c.b16 %v403, %v401
    %v444 = vpack.c.b16 %v406, %v404
    %v445 = vpack.c.b16 %v407, %v405
    %v446 = vpack.c.b16 %v410, %v408
    %v447 = vpack.c.b16 %v411, %v409
    %v448 = vpack.c.b16 %v414, %v412
    %v449 = vpack.c.b16 %v415, %v413
    %v450 = vpack.c.b16 %v418, %v416
    %v451 = vpack.c.b16 %v419, %v417
    %484 = vmatprep.subr.bf16.mxu0 %v435
    %485 = vmatpush1.bf16.msra.mxu0 %v434
    %486 = vmatprep.subr.bf16.mxu0 %v433
    %487 = vmatpush1.bf16.msra.mxu0 %v432
    %488 = vmatprep.subr.bf16.mxu0 %v431
    %489 = vmatpush1.bf16.msra.mxu0 %v430
    %490 = vmatprep.subr.bf16.mxu0 %v429
    %491 = vmatpush1.bf16.msra.mxu0 %v428
    %492 = vmatprep.subr.bf16.mxu0 %v427
    %493 = vmatpush1.bf16.msra.mxu0 %v426
    %494 = vmatprep.subr.bf16.mxu0 %v425
    %495 = vmatpush1.bf16.msra.mxu0 %v424
    %496 = vmatprep.subr.bf16.mxu0 %v423
    %497 = vmatpush1.bf16.msra.mxu0 %v422
    %498 = vmatprep.subr.bf16.mxu0 %v421
    %499 = vmatpush1.bf16.msra.mxu0 %v420
    %500 = vmatprep.subr.bf16.mxu0 %v451
    %501 = vmatpush2.bf16.msra.mxu0 %v450
    %502 = vmatprep.subr.bf16.mxu0 %v449
    %503 = vmatpush2.bf16.msra.mxu0 %v448
    %504 = vmatprep.subr.bf16.mxu0 %v447
    %505 = vmatpush2.bf16.msra.mxu0 %v446
    %506 = vmatprep.subr.bf16.mxu0 %v445
    %507 = vmatpush2.bf16.msra.mxu0 %v444
    %508 = vmatprep.subr.bf16.mxu0 %v443
    %509 = vmatpush2.bf16.msra.mxu0 %v442
    %510 = vmatprep.subr.bf16.mxu0 %v441
    %511 = vmatpush2.bf16.msra.mxu0 %v440
    %512 = vmatprep.subr.bf16.mxu0 %v439
    %513 = vmatpush2.bf16.msra.mxu0 %v438
    %514 = vmatprep.subr.bf16.mxu0 %v437
    %515 = vmatpush2.bf16.msra.mxu0 %v436
    %516 = vmatprep.mubr.bf16.mxu0 %v275
    %517 = vmatmul.mubr.bf16.gmra.mxu0 %v274
    %v518 = vpop.f32.mrf.mxu0
    %v519 = vadd.f32 %v317, %v518
    %v520 = vpop.f32.mrf.mxu0
    %v521 = vadd.f32 %v321, %v520
    %v522 = vpop.f32.mrf.mxu0
    %v523 = vadd.f32 %v317, %v522
    %v524 = vpop.f32.mrf.mxu0
    %v525 = vadd.f32 %v321, %v524
    %526 = vdwg.mxu0
    %v527 = vmax.f32 %v519, 0.0
    %v528 = vmax.f32 %v521, 0.0
    %v529 = vmax.f32 %v523, 0.0
    %v530 = vmax.f32 %v525, 0.0
    %v531 = vadd.f32 %v527, %v528
    %532 = vadd.xlane.f32.xlu0 %v531
    %v533 = vpop.xlane.xlu0 %532
    %v534 = vadd.f32 %v529, %v530
    %535 = vadd.xlane.f32.xlu0 %v534
    %v536 = vpop.xlane.xlu0 %535
    %v537 = vmul.f32 %v533, %v213
    %v538 = vmul.f32 %v536, %v213
    %v539 = vmul.f32 %v527, %v527
    %v540 = vmul.f32 %v528, %v528
    %v541 = vmul.f32 %v529, %v529
    %v542 = vmul.f32 %v530, %v530
    %v543 = vadd.f32 %v539, %v540
    %544 = vadd.xlane.f32.xlu0 %v543
    %v545 = vpop.xlane.xlu0 %544
    %v546 = vadd.f32 %v541, %v542
    %547 = vadd.xlane.f32.xlu0 %v546
    %v548 = vpop.xlane.xlu0 %547
    %v549 = vmul.f32 %v545, %v213
    %v550 = vmul.f32 %v548, %v213
    %v551 = vmul.f32 %v537, %v537
    %v552 = vmul.f32 %v538, %v538
    %v553 = vsub.f32 %v549, %v551
    %v554 = vsub.f32 %v550, %v552
    %v555 = vadd.f32 %v553, 1e-05
    %v556 = vadd.f32 %v554, 1e-05
    %v557 = vrsqrt.pop %v555
    %v558 = vrsqrt.pop %v556
    %v559 = vsub.f32 %v527, %v537
    %v560 = vsub.f32 %v528, %v537
    %v561 = vsub.f32 %v529, %v538
    %v562 = vsub.f32 %v530, %v538
    %v563 = vmul.f32 %v559, %v557
    %v564 = vmul.f32 %v560, %v557
    %v565 = vmul.f32 %v561, %v558
    %v566 = vmul.f32 %v562, %v558
    %v568 = vlaneseq
    %v569 = vshrl.u32 %v568, 7
    %v570 = vsub.s32 0, %v569
    %v571 = vrot.slane %v278, %v570
    %v572 = vlaneseq
    %v573 = vshrl.u32 %v572, 7
    %v574 = vsub.s32 1, %v573
    %v575 = vrot.slane %v278, %v574
    %v578 = vmul.f32 %v563, %v571
    %v579 = vmul.f32 %v564, %v575
    %v580 = vmul.f32 %v565, %v571
    %v581 = vmul.f32 %v566, %v575
    %v583 = vlaneseq
    %v584 = vshrl.u32 %v583, 7
    %v585 = vsub.s32 0, %v584
    %v586 = vrot.slane %v280, %v585
    %v587 = vlaneseq
    %v588 = vshrl.u32 %v587, 7
    %v589 = vsub.s32 1, %v588
    %v590 = vrot.slane %v280, %v589
    %v593 = vadd.f32 %v578, %v586
    %v594 = vadd.f32 %v579, %v590
    %v595 = vadd.f32 %v580, %v586
    %v596 = vadd.f32 %v581, %v590
    %v597 = vpack.c.bf16 %v595, %v593
    %v598 = vpack.c.bf16 %v596, %v594
    %v599 = vld [vmem:[%s6] sm:$0x1]
    %v600 = vld [vmem:[%s6 + $0x1] sm:$0x1]
    %v601 = vld [vmem:[%s6 + $0x2] sm:$0x1]
    %v602 = vld [vmem:[#allocation11] sm:$0xf]
    %v603 = vld [vmem:[#allocation11 + $0x4] sm:$0xf]
    %v604 = vld [vmem:[#allocation11 + $0x8] sm:$0xf]
    %v605 = vld [vmem:[#allocation11 + $0xc] sm:$0xf]
    %v606 = vld [vmem:[#allocation11 + $0x10] sm:$0xf]
    %v607 = vld [vmem:[#allocation11 + $0x14] sm:$0xf]
    %v608 = vld [vmem:[#allocation11 + $0x18] sm:$0xf]
    %v609 = vld [vmem:[#allocation11 + $0x1c] sm:$0xf]
    %v610 = vld [vmem:[#allocation11 + $0x20] sm:$0xf]
    %v611 = vld [vmem:[#allocation11 + $0x24] sm:$0xf]
    %v612 = vld [vmem:[#allocation11 + $0x28] sm:$0xf]
    %v613 = vld [vmem:[#allocation11 + $0x2c] sm:$0xf]
    %v614 = vld [vmem:[#allocation11 + $0x30] sm:$0xf]
    %v615 = vld [vmem:[#allocation11 + $0x34] sm:$0xf]
    %v616 = vld [vmem:[#allocation11 + $0x38] sm:$0xf]
    %v617 = vld [vmem:[#allocation11 + $0x3c] sm:$0xf]
    %v618 = vld [vmem:[#allocation11 + $0x40] sm:$0xf]
    %v619 = vld [vmem:[#allocation11 + $0x44] sm:$0xf]
    %v620 = vld [vmem:[#allocation11 + $0x48] sm:$0xf]
    %v621 = vld [vmem:[#allocation11 + $0x4c] sm:$0xf]
    %v622 = vld [vmem:[#allocation11 + $0x50] sm:$0xf]
    %v623 = vld [vmem:[#allocation11 + $0x54] sm:$0xf]
    %v624 = vld [vmem:[#allocation11 + $0x58] sm:$0xf]
    %v625 = vld [vmem:[#allocation11 + $0x5c] sm:$0xf]
    %v626 = vld [vmem:[#allocation11 + $0x60] sm:$0xf]
    %v627 = vld [vmem:[#allocation11 + $0x64] sm:$0xf]
    %v628 = vld [vmem:[#allocation11 + $0x68] sm:$0xf]
    %v629 = vld [vmem:[#allocation11 + $0x6c] sm:$0xf]
    %v630 = vld [vmem:[#allocation11 + $0x70] sm:$0xf]
    %v631 = vld [vmem:[#allocation11 + $0x74] sm:$0xf]
    %v632 = vld [vmem:[#allocation11 + $0x78] sm:$0xf]
    %v633 = vld [vmem:[#allocation11 + $0x7c] sm:$0xf]
    %v634 = vlaneseq
    %v635 = vshrl.u32 %v634, 7
    %v636 = vsub.s32 0, %v635
    %v637 = vrot.slane %v599, %v636
    %v670 = vunpack.c.l.b16 %v602
    %v671 = vunpack.c.l.b16 %v603
    %v672 = vunpack.c.l.b16 %v604
    %v673 = vunpack.c.l.b16 %v605
    %v674 = vunpack.c.l.b16 %v606
    %v675 = vunpack.c.l.b16 %v607
    %v676 = vunpack.c.l.b16 %v608
    %v677 = vunpack.c.l.b16 %v609
    %v678 = vunpack.c.l.b16 %v610
    %v679 = vunpack.c.l.b16 %v611
    %v680 = vunpack.c.l.b16 %v612
    %v681 = vunpack.c.l.b16 %v613
    %v682 = vunpack.c.l.b16 %v614
    %v683 = vunpack.c.l.b16 %v615
    %v684 = vunpack.c.l.b16 %v616
    %v685 = vunpack.c.l.b16 %v617
    %v686 = vunpack.c.l.b16 %v618
    %v687 = vunpack.c.l.b16 %v619
    %v688 = vunpack.c.l.b16 %v620
    %v689 = vunpack.c.l.b16 %v621
    %v690 = vunpack.c.l.b16 %v622
    %v691 = vunpack.c.l.b16 %v623
    %v692 = vunpack.c.l.b16 %v624
    %v693 = vunpack.c.l.b16 %v625
    %v694 = vunpack.c.l.b16 %v626
    %v695 = vunpack.c.l.b16 %v627
    %v696 = vunpack.c.l.b16 %v628
    %v697 = vunpack.c.l.b16 %v629
    %v698 = vunpack.c.l.b16 %v630
    %v699 = vunpack.c.l.b16 %v631
    %v700 = vunpack.c.l.b16 %v632
    %v701 = vunpack.c.l.b16 %v633
    %v702 = vpack.c.b16 %v671, %v670
    %v703 = vpack.c.b16 %v673, %v672
    %v704 = vpack.c.b16 %v675, %v674
    %v705 = vpack.c.b16 %v677, %v676
    %v706 = vpack.c.b16 %v679, %v678
    %v707 = vpack.c.b16 %v681, %v680
    %v708 = vpack.c.b16 %v683, %v682
    %v709 = vpack.c.b16 %v685, %v684
    %v710 = vpack.c.b16 %v687, %v686
    %v711 = vpack.c.b16 %v689, %v688
    %v712 = vpack.c.b16 %v691, %v690
    %v713 = vpack.c.b16 %v693, %v692
    %v714 = vpack.c.b16 %v695, %v694
    %v715 = vpack.c.b16 %v697, %v696
    %v716 = vpack.c.b16 %v699, %v698
    %v717 = vpack.c.b16 %v701, %v700
    %734 = vmatprep.subr.bf16.mxu0 0
    %735 = vmatpush1.bf16.msra.mxu0 %v709
    %736 = vmatprep.subr.bf16.mxu0 0
    %737 = vmatpush1.bf16.msra.mxu0 %v708
    %738 = vmatprep.subr.bf16.mxu0 0
    %739 = vmatpush1.bf16.msra.mxu0 %v707
    %740 = vmatprep.subr.bf16.mxu0 0
    %741 = vmatpush1.bf16.msra.mxu0 %v706
    %742 = vmatprep.subr.bf16.mxu0 0
    %743 = vmatpush1.bf16.msra.mxu0 %v705
    %744 = vmatprep.subr.bf16.mxu0 0
    %745 = vmatpush1.bf16.msra.mxu0 %v704
    %746 = vmatprep.subr.bf16.mxu0 0
    %747 = vmatpush1.bf16.msra.mxu0 %v703
    %748 = vmatprep.subr.bf16.mxu0 0
    %749 = vmatpush1.bf16.msra.mxu0 %v702
    %750 = vmatprep.subr.bf16.mxu0 0
    %751 = vmatpush2.bf16.msra.mxu0 %v717
    %752 = vmatprep.subr.bf16.mxu0 0
    %753 = vmatpush2.bf16.msra.mxu0 %v716
    %754 = vmatprep.subr.bf16.mxu0 0
    %755 = vmatpush2.bf16.msra.mxu0 %v715
    %756 = vmatprep.subr.bf16.mxu0 0
    %757 = vmatpush2.bf16.msra.mxu0 %v714
    %758 = vmatprep.subr.bf16.mxu0 0
    %759 = vmatpush2.bf16.msra.mxu0 %v713
    %760 = vmatprep.subr.bf16.mxu0 0
    %761 = vmatpush2.bf16.msra.mxu0 %v712
    %762 = vmatprep.subr.bf16.mxu0 0
    %763 = vmatpush2.bf16.msra.mxu0 %v711
    %764 = vmatprep.subr.bf16.mxu0 0
    %765 = vmatpush2.bf16.msra.mxu0 %v710
    %766 = vmatprep.mubr.bf16.mxu0 %v598
    %767 = vmatmul.mubr.bf16.gmra.mxu0 %v597
    %v768 = vpop.f32.mrf.mxu0
    %v769 = vadd.f32 %v637, %v768
    %v770 = vpop.f32.mrf.mxu0
    %v771 = vpop.f32.mrf.mxu0
    %v772 = vadd.f32 %v637, %v771
    %v773 = vpop.f32.mrf.mxu0
    %774 = vdwg.mxu0
    %v775 = vmax.f32 %v769, 0.0
    %v776 = vmax.f32 %v772, 0.0
    %777 = vadd.xlane.f32.xlu0 %v775
    %v778 = vpop.xlane.xlu0 %777
    %779 = vadd.xlane.f32.xlu0 %v776
    %v780 = vpop.xlane.xlu0 %779
    %v781 = vrcp.pop 128.0
    %v782 = vmul.f32 %v778, %v781
    %v783 = vmul.f32 %v780, %v781
    %v784 = vmul.f32 %v775, %v775
    %v785 = vmul.f32 %v776, %v776
    %786 = vadd.xlane.f32.xlu0 %v784
    %v787 = vpop.xlane.xlu0 %786
    %788 = vadd.xlane.f32.xlu0 %v785
    %v789 = vpop.xlane.xlu0 %788
    %v790 = vmul.f32 %v787, %v781
    %v791 = vmul.f32 %v789, %v781
    %v792 = vmul.f32 %v782, %v782
    %v793 = vmul.f32 %v783, %v783
    %v794 = vsub.f32 %v790, %v792
    %v795 = vsub.f32 %v791, %v793
    %v796 = vadd.f32 %v794, 1e-05
    %v797 = vadd.f32 %v795, 1e-05
    %v798 = vrsqrt.pop %v796
    %v799 = vrsqrt.pop %v797
    %v800 = vsub.f32 %v775, %v782
    %v801 = vsub.f32 %v776, %v783
    %v802 = vmul.f32 %v800, %v798
    %v803 = vmul.f32 %v801, %v799
    %v804 = vlaneseq
    %v805 = vshrl.u32 %v804, 7
    %v806 = vsub.s32 0, %v805
    %v807 = vrot.slane %v600, %v806
    %v808 = vmul.f32 %v802, %v807
    %v809 = vmul.f32 %v803, %v807
    %v810 = vlaneseq
    %v811 = vshrl.u32 %v810, 7
    %v812 = vsub.s32 0, %v811
    %v813 = vrot.slane %v601, %v812
    %v814 = vadd.f32 %v808, %v813
    %v815 = vadd.f32 %v809, %v813
    %v816 = vpack.c.bf16 %v815, %v814
    %v817 = vld [vmem:[#allocation13] sm:$0xf]
    %v818 = vld [vmem:[#allocation13 + $0x4] sm:$0xf]
    %v819 = vld [vmem:[#allocation13 + $0x8] sm:$0xf]
    %v820 = vld [vmem:[#allocation13 + $0xc] sm:$0xf]
    %v821 = vld [vmem:[#allocation13 + $0x10] sm:$0xf]
    %v822 = vld [vmem:[#allocation13 + $0x14] sm:$0xf]
    %v823 = vld [vmem:[#allocation13 + $0x18] sm:$0xf]
    %v824 = vld [vmem:[#allocation13 + $0x1c] sm:$0xf]
    %v825 = vld [vmem:[#allocation13 + $0x20] sm:$0xf]
    %v826 = vld [vmem:[#allocation13 + $0x24] sm:$0xf]
    %v827 = vld [vmem:[#allocation13 + $0x28] sm:$0xf]
    %v828 = vld [vmem:[#allocation13 + $0x2c] sm:$0xf]
    %v829 = vld [vmem:[#allocation13 + $0x30] sm:$0xf]
    %v830 = vld [vmem:[#allocation13 + $0x34] sm:$0xf]
    %v831 = vld [vmem:[#allocation13 + $0x38] sm:$0xf]
    %v832 = vld [vmem:[#allocation13 + $0x3c] sm:$0xf]
    %v833 = vld [vmem:[%s8] sm:$0x1]
    %v835 = vlaneseq
    %v836 = vshrl.u32 %v835, 7
    %v837 = vsub.s32 0, %v836
    %v838 = vrot.slane %v833, %v837
    %v856 = vunpack.c.l.b16 %v817
    %v857 = vunpack.c.l.b16 %v818
    %v858 = vunpack.c.l.b16 %v819
    %v859 = vunpack.c.l.b16 %v820
    %v860 = vunpack.c.l.b16 %v821
    %v861 = vunpack.c.l.b16 %v822
    %v862 = vunpack.c.l.b16 %v823
    %v863 = vunpack.c.l.b16 %v824
    %v864 = vunpack.c.l.b16 %v825
    %v865 = vunpack.c.l.b16 %v826
    %v866 = vunpack.c.l.b16 %v827
    %v867 = vunpack.c.l.b16 %v828
    %v868 = vunpack.c.l.b16 %v829
    %v869 = vunpack.c.l.b16 %v830
    %v870 = vunpack.c.l.b16 %v831
    %v871 = vunpack.c.l.b16 %v832
    %v872 = vpack.c.b16 %v857, %v856
    %v873 = vpack.c.b16 %v859, %v858
    %v874 = vpack.c.b16 %v861, %v860
    %v875 = vpack.c.b16 %v863, %v862
    %v876 = vpack.c.b16 %v865, %v864
    %v877 = vpack.c.b16 %v867, %v866
    %v878 = vpack.c.b16 %v869, %v868
    %v879 = vpack.c.b16 %v871, %v870
    %888 = vmatprep.subr.bf16.mxu0 0
    %889 = vmatpush1.bf16.msra.mxu0 %v879
    %890 = vmatprep.subr.bf16.mxu0 0
    %891 = vmatpush1.bf16.msra.mxu0 %v878
    %892 = vmatprep.subr.bf16.mxu0 0
    %893 = vmatpush1.bf16.msra.mxu0 %v877
    %894 = vmatprep.subr.bf16.mxu0 0
    %895 = vmatpush1.bf16.msra.mxu0 %v876
    %896 = vmatprep.subr.bf16.mxu0 0
    %897 = vmatpush1.bf16.msra.mxu0 %v875
    %898 = vmatprep.subr.bf16.mxu0 0
    %899 = vmatpush1.bf16.msra.mxu0 %v874
    %900 = vmatprep.subr.bf16.mxu0 0
    %901 = vmatpush1.bf16.msra.mxu0 %v873
    %902 = vmatprep.subr.bf16.mxu0 0
    %903 = vmatpush1.bf16.msra.mxu0 %v872
    %904 = vmatprep.subr.bf16.mxu0 0
    %905 = vmatpush2.bf16.msra.mxu0 0
    %906 = vmatprep.subr.bf16.mxu0 0
    %907 = vmatpush2.bf16.msra.mxu0 0
    %908 = vmatprep.subr.bf16.mxu0 0
    %909 = vmatpush2.bf16.msra.mxu0 0
    %910 = vmatprep.subr.bf16.mxu0 0
    %911 = vmatpush2.bf16.msra.mxu0 0
    %912 = vmatprep.subr.bf16.mxu0 0
    %913 = vmatpush2.bf16.msra.mxu0 0
    %914 = vmatprep.subr.bf16.mxu0 0
    %915 = vmatpush2.bf16.msra.mxu0 0
    %916 = vmatprep.subr.bf16.mxu0 0
    %917 = vmatpush2.bf16.msra.mxu0 0
    %918 = vmatprep.subr.bf16.mxu0 0
    %919 = vmatpush2.bf16.msra.mxu0 0
    %920 = vmatprep.mubr.bf16.mxu0 0
    %921 = vmatmul.mubr.bf16.gmra.mxu0 %v816
    %v922 = vpop.f32.mrf.mxu0
    %v923 = vadd.f32 %v838, %v922
    %v924 = vpop.f32.mrf.mxu0
    %v925 = vpop.f32.mrf.mxu0
    %v926 = vadd.f32 %v838, %v925
    %v927 = vpop.f32.mrf.mxu0
    %928 = vdwg.mxu0
    %v929 = vpack.c.bf16 %v926, %v923
    %v931 = vunpack.c.l.b16 %v929
    %v932 = vunpack.c.h.b16 %v929
    %v933 = vpack.c.b16 %v931, %v931
    %v934 = vpack.c.b16 %v932, %v932
    %937 = vst [vmem:[#allocation14] sm:$0xf] %v933
    %938 = vst [vmem:[#allocation14 + $0x4] sm:$0xf] %v934
    // Predicated region
    $region66: #{_dqn_pallas.1} parent=1 // pred_check
      _
    $region67: #{_dqn_pallas.1} parent=1 // pred_check_branch
      %940 = sbr.rel (0) target = $region69
    $region68: #{_dqn_pallas.1} parent=1 // pred_region
      %s942 = ssub.s32 128, 128
      %943 = vsyncadd [#allocation4], %s942
      %s944 = sshll.u32 [#allocation14], 4
      %s945 = int_to_ptr.vmem [resolvable:$true] %s944
      %950 = dma.vmem_to_hbm [thread:$0]  %s945, 128, %s9, [#allocation4], 64, 64, 4
    $region69: #{_dqn_pallas.1} parent=1 // pred_fallthru
      _
    // Predicated region
    $region70: #{_dqn_pallas.1} parent=1 // pred_check
      _
    $region71: #{_dqn_pallas.1} parent=1 // pred_check_branch
      %952 = sbr.rel (0) target = $region73
    $region72: #{_dqn_pallas.1} parent=1 // pred_region
      %953 = dma.done [#allocation4], 128
    $region73: #{_dqn_pallas.1} parent=1 // pred_fallthru
      _
    %954 = vsyncpa [#allocation3], 1
    %955 = vsyncpa [#allocation6], 1
    %956 = vsyncpa [#allocation9], 1
    %957 = vsyncpa [#allocation12], 1
    %958 = vsyncpa [#allocation4], 1

</llo_original>
